<compile_context>
chip_gen: v7x
topology: tpu7x:2x2x1
jax: 0.10.0
libtpu: 0.0.40
codegen_flags: <defaults>
</compile_context>

<pallas_src>
import functools
import math

import jax
import jax.numpy as jnp
from jax.experimental import pallas as pl
from jax.experimental.pallas import tpu as pltpu


def _round_up(x, m):
    return ((x + m - 1) // m) * m


def _pick_tile_128(dim_padded, cap):
    """Largest multiple of 128 that divides dim_padded (itself a 128-multiple)
    and is <= cap (always >= 128)."""
    best = 128
    t = 128
    while t <= min(dim_padded, cap):
        if dim_padded % t == 0:
            best = t
        t += 128
    return best


def _choose_m_tiling(M, tm_max):
    """Return (Mp, tm): tm a multiple of 16, Mp a multiple of tm, padding waste
    minimised; prefer >=2 M-blocks (parallel axis / v7x's 2 TensorCores) when
    it costs no extra padding."""
    Mp = _round_up(max(M, 16), 16)
    if Mp <= tm_max:
        if Mp >= 256 and Mp % 32 == 0:
            return Mp, Mp // 2          # two blocks, zero extra padding
        return Mp, Mp
    best_tm, best_pad = 16, None
    t = 16
    while t <= tm_max:
        pad = _round_up(Mp, t) - Mp
        if best_pad is None or pad <= best_pad:   # ties -> larger tile wins
            best_tm, best_pad = t, pad
        t += 16
    return _round_up(Mp, best_tm), best_tm


def _tpu_config():
    """(vmem_capacity_bytes, mxu_width) for the attached TPU generation."""
    try:
        kind = jax.devices()[0].device_kind.lower()
    except Exception:
        kind = ""
    if "v7" in kind or "7x" in kind:
        return 64 * 1024 * 1024, 256      # v7x: half the VMEM, 256x256 MXU
    if "v6" in kind:
        return 128 * 1024 * 1024, 256     # v6e
    if "v5" in kind or "v4" in kind:
        return 128 * 1024 * 1024, 128     # v4/v5: 128-wide MXU
    return 64 * 1024 * 1024, 256          # unknown: conservative VMEM


# ---------------------------------------------------------------------------
# Tiled single-layer kernel:  o = [relu](x @ w + b), M/N/K grid, f32 acc.
# x and w blocks arrive already in bf16 (cast done once in the wrapper/init).
# ---------------------------------------------------------------------------
def _linear_tiled_kernel(x_ref, w_ref, b_ref, o_ref, acc_ref, *, apply_relu):
    k = pl.program_id(2)

    @pl.when(k == 0)
    def _():
        acc_ref[...] = jnp.zeros_like(acc_ref)

    acc_ref[...] += jnp.dot(x_ref[...], w_ref[...],
                            preferred_element_type=jnp.float32)

    @pl.when(k == pl.num_programs(2) - 1)
    def _():
        y = acc_ref[...] + b_ref[...]             # f32 epilogue
        if apply_relu:
            y = jnp.maximum(y, 0.0)
        o_ref[...] = y.astype(o_ref.dtype)


def _linear_tiled(x_pad, w_pad, b_pad, *, apply_relu, out_dtype, tm, tk, tn,
                  vmem_limit):
    """x_pad: (Mp, Kp) bf16, w_pad: (Kp, Np) bf16, b_pad: (1, Np) f32."""
    Mp, Kp = x_pad.shape
    Kp2, Np = w_pad.shape
    assert Kp == Kp2
    grid = (Mp // tm, Np // tn, Kp // tk)
    kernel = functools.partial(_linear_tiled_kernel, apply_relu=apply_relu)
    flops = 2 * Mp * Kp * Np
    bytes_accessed = (Mp * Kp * x_pad.dtype.itemsize
                      + Kp * Np * w_pad.dtype.itemsize
                      + Np * 4
                      + Mp * Np * jnp.dtype(out_dtype).itemsize)
    return pl.pallas_call(
        kernel,
        out_shape=jax.ShapeDtypeStruct((Mp, Np), out_dtype),
        grid=grid,
        in_specs=[
            pl.BlockSpec((tm, tk), lambda i, j, k: (i, k)),
            pl.BlockSpec((tk, tn), lambda i, j, k: (k, j)),
            pl.BlockSpec((1, tn), lambda i, j, k: (0, j)),   # bias follows out column
        ],
        out_specs=pl.BlockSpec((tm, tn), lambda i, j, k: (i, j)),
        scratch_shapes=[pltpu.VMEM((tm, tn), jnp.float32)],
        compiler_params=pltpu.CompilerParams(
            dimension_semantics=("parallel", "parallel", "arbitrary"),
            vmem_limit_bytes=vmem_limit,
        ),
        cost_estimate=pl.CostEstimate(
            flops=flops, transcendentals=0, bytes_accessed=bytes_accessed),
    )(x_pad, w_pad, b_pad)


# ---------------------------------------------------------------------------
# Fused whole-MLP kernel for small models: all (padded) weights VMEM-resident,
# activation never round-trips to HBM between layers, grid over M only.
# Per-layer static slices of the weight stack avoid matmul-ing zero columns.
# ---------------------------------------------------------------------------
def _mlp_fused_kernel(x_ref, w_ref, b_ref, o_ref, *, layer_dims,
                      is_activation_last):
    num_layers = len(layer_dims) - 1
    act = x_ref[...]                                   # bf16 (tm, Kp0)
    for l in range(num_layers):
        kp, np_ = layer_dims[l], layer_dims[l + 1]
        y = jnp.dot(act, w_ref[l, :kp, :np_],          # static slice -> no copy
                    preferred_element_type=jnp.float32)
        y = y + b_ref[l, :, :np_]                      # (1, np_) f32 broadcast
        if (l < num_layers - 1) or is_activation_last:
            y = jnp.maximum(y, 0.0)
        if l < num_layers - 1:
            act = y.astype(jnp.bfloat16)
        else:
            o_ref[...] = y.astype(o_ref.dtype)


def _mlp_fused(x_pad, w_stack, b_stack, *, layer_dims, is_activation_last,
               tm, out_dtype, vmem_limit):
    Mp, Kp0 = x_pad.shape
    L, Dp, _ = w_stack.shape
    NpL = layer_dims[-1]
    kernel = functools.partial(_mlp_fused_kernel, layer_dims=layer_dims,
                               is_activation_last=is_activation_last)
    flops = sum(2 * Mp * layer_dims[l] * layer_dims[l + 1] for l in range(L))
    bytes_accessed = (Mp * Kp0 * 2 + L * Dp * Dp * 2 + L * Dp * 4
                      + Mp * NpL * jnp.dtype(out_dtype).itemsize)
    return pl.pallas_call(
        kernel,
        out_shape=jax.ShapeDtypeStruct((Mp, NpL), out_dtype),
        grid=(Mp // tm,),
        in_specs=[
            pl.BlockSpec((tm, Kp0), lambda i: (i, 0)),
            pl.BlockSpec((L, Dp, Dp), lambda i: (0, 0, 0)),   # resident, no re-DMA
            pl.BlockSpec((L, 1, Dp), lambda i: (0, 0, 0)),    # resident
        ],
        out_specs=pl.BlockSpec((tm, NpL), lambda i: (i, 0)),
        compiler_params=pltpu.CompilerParams(
            dimension_semantics=("parallel",),
            vmem_limit_bytes=vmem_limit,
        ),
        cost_estimate=pl.CostEstimate(
            flops=flops, transcendentals=0, bytes_accessed=bytes_accessed),
    )(x_pad, w_stack, b_stack)


# ---------------------------------------------------------------------------
# Module wrapper
# ---------------------------------------------------------------------------
class MLPPallas:
    """JAX/Pallas port of common/nets/layer.py::MLP.

    Precision trade-off (documented): MXU inputs and inter-layer activations
    are bf16 with f32 accumulation / f32 bias+ReLU epilogue; output is f32.
    """

    def __init__(self, input_dim, hidden_dim, output_dim, num_layers,
                 is_activation_last=False, key=None, use_fused=None,
                 tm_max=None, tk_max=None, tn_max=None):
        self.num_layers = num_layers
        self.is_activation_last = is_activation_last
        if not isinstance(hidden_dim, list):
            h = [hidden_dim] * (num_layers - 1)
        else:
            assert len(hidden_dim) == num_layers - 1
            h = list(hidden_dim)
        self.all_dims = [input_dim] + h + [output_dim]
        self.padded_dims = [_round_up(d, 128) for d in self.all_dims]

        # Generation-aware tile caps / VMEM budgets.
        vmem_bytes, mxu = _tpu_config()
        self.vmem_bytes = vmem_bytes
        self.tm_max = 512 if tm_max is None else tm_max
        self.tn_max = (512 if mxu >= 256 else 256) if tn_max is None else tn_max
        self.tk_max = 1024 if tk_max is None else tk_max
        self.tiled_vmem_limit = int(min(64 * 1024 * 1024, vmem_bytes // 2))

        if key is None:
            key = jax.random.PRNGKey(0)
        # PyTorch-layout f32 master weights (out, in) — source of truth.
        self.weights, self.biases = [], []
        for i in range(num_layers):
            fan_in, fan_out = self.all_dims[i], self.all_dims[i + 1]
            key, kw, kb = jax.random.split(key, 3)
            bound = 1.0 / math.sqrt(fan_in)           # nn.Linear default init
            w = jax.random.uniform(kw, (fan_out, fan_in), jnp.float32,
                                   minval=-bound, maxval=bound)
            b = jax.random.uniform(kb, (fan_out,), jnp.float32,
                                   minval=-bound, maxval=bound)
            self.weights.append(w)
            self.biases.append(b)

        # Fusion decision: whole padded bf16 weight stack VMEM-resident.
        # Footprint accounts for the pipeline's 2x buffering of every block
        # plus activation-tile slack; budget is generation-aware.
        Dp = max(self.padded_dims)
        self.Dp = Dp
        L = num_layers
        tm_guess = self.tm_max
        est_fused = (2 * (L * Dp * Dp * 2 + L * Dp * 4)          # weights+bias, 2x buffered
                     + 2 * tm_guess * self.padded_dims[0] * 2    # x bf16, 2x
                     + 2 * tm_guess * self.padded_dims[-1] * 4   # out f32, 2x
                     + 3 * tm_guess * Dp * 4)                    # f32 intermediates slack
        fused_budget = int(0.4 * vmem_bytes)        # ~51 MiB (v5e/v6e), ~25 MiB (v7x)
        if use_fused is None:
            use_fused = est_fused <= fused_budget
        self.use_fused = use_fused
        self.fused_vmem_limit = int(min(vmem_bytes - 16 * 1024 * 1024,
                                        100 * 1024 * 1024,
                                        max(32 * 1024 * 1024,
                                            est_fused + 8 * 1024 * 1024)))

        # One-time layout work: pre-transpose + zero-pad + bf16 cast.
        if self.use_fused:
            w_stack = jnp.zeros((L, Dp, Dp), jnp.bfloat16)
            b_stack = jnp.zeros((L, 1, Dp), jnp.float32)
            for i in range(L):
                k_i, n_i = self.all_dims[i], self.all_dims[i + 1]
                w_stack = w_stack.at[i, :k_i, :n_i].set(
                    self.weights[i].T.astype(jnp.bfloat16))
                b_stack = b_stack.at[i, 0, :n_i].set(self.biases[i])
            self.w_stack = w_stack
            self.b_stack = b_stack
        else:
            self.w_pad, self.b_pad, self.tk, self.tn = [], [], [], []
            for i in range(L):
                Kp, Np = self.padded_dims[i], self.padded_dims[i + 1]
                k_i, n_i = self.all_dims[i], self.all_dims[i + 1]
                w = jnp.zeros((Kp, Np), jnp.bfloat16).at[:k_i, :n_i].set(
                    self.weights[i].T.astype(jnp.bfloat16))
                b = jnp.zeros((1, Np), jnp.float32).at[0, :n_i].set(self.biases[i])
                self.w_pad.append(w)
                self.b_pad.append(b)
                self.tk.append(_pick_tile_128(Kp, self.tk_max))
                self.tn.append(_pick_tile_128(Np, self.tn_max))

    # -- forward paths ------------------------------------------------------
    def _forward_fused(self, x2d):
        M, K = x2d.shape
        Mp, tm = _choose_m_tiling(M, self.tm_max)
        Kp0 = self.padded_dims[0]
        # bf16 cast fused with the pad: half-width DMA, no in-kernel cast.
        x_pad = jnp.pad(x2d.astype(jnp.bfloat16), ((0, Mp - M), (0, Kp0 - K)))
        out = _mlp_fused(x_pad, self.w_stack, self.b_stack,
                         layer_dims=tuple(self.padded_dims),
                         is_activation_last=self.is_activation_last,
                         tm=tm, out_dtype=jnp.float32,
                         vmem_limit=self.fused_vmem_limit)
        return out[:M, :self.all_dims[-1]]

    def _forward_tiled(self, x2d):
        M, K = x2d.shape
        Mp, tm = _choose_m_tiling(M, self.tm_max)
        act = jnp.pad(x2d.astype(jnp.bfloat16),
                      ((0, Mp - M), (0, self.padded_dims[0] - K)))
        for l in range(self.num_layers):
            is_last = l == self.num_layers - 1
            apply_relu = (not is_last) or self.is_activation_last
            out_dtype = jnp.float32 if is_last else jnp.bfloat16
            # Padded columns stay exactly zero layer-to-layer (zero-padded
            # weights/biases), so no per-layer slice/re-pad is needed.
            act = _linear_tiled(act, self.w_pad[l], self.b_pad[l],
                                apply_relu=apply_relu, out_dtype=out_dtype,
                                tm=tm, tk=self.tk[l], tn=self.tn[l],
                                vmem_limit=self.tiled_vmem_limit)
        return act[:M, :self.all_dims[-1]]

    def __call__(self, x):
        orig_shape = x.shape
        x2d = x.reshape(-1, orig_shape[-1])
        y = self._forward_fused(x2d) if self.use_fused else self._forward_tiled(x2d)
        return y.reshape(orig_shape[:-1] + (self.all_dims[-1],))


def _reference_forward(mlp, x):
    """Pure-jnp f32 reference for the correctness check."""
    y = x.astype(jnp.float32)
    for i in range(mlp.num_layers):
        is_last = i == mlp.num_layers - 1
        y = y @ mlp.weights[i].T + mlp.biases[i]
        if (not is_last) or mlp.is_activation_last:
            y = jnp.maximum(y, 0.0)
    return y


if __name__ == "__main__":
    key = jax.random.PRNGKey(0)
    kx, kp, kp2 = jax.random.split(key, 3)

    # 1) Small MLP (typical use) -> fused single-kernel path.
    batch, seq, input_dim, hidden_dim, output_dim, num_layers = 2, 8, 32, 64, 16, 3
    x = jax.random.normal(kx, (batch, seq, input_dim), jnp.float32)
    mlp_fused = MLPPallas(input_dim, hidden_dim, output_dim, num_layers,
                          is_activation_last=False, key=kp)
    out_fused = jax.block_until_ready(mlp_fused(x))
    ref_fused = _reference_forward(mlp_fused, x)
    assert out_fused.shape == (batch, seq, output_dim), out_fused.shape
    assert jnp.allclose(out_fused, ref_fused, atol=5e-2, rtol=5e-2), \
        "fused path mismatch vs reference"

    # 2) Per-layer tiled path, forced with small tile caps so the N and K grid
    #    axes have >1 block (exercises accumulator init/finalize + bias j-index).
    mlp_tiled = MLPPallas(200, [160, 144], 96, 3, is_activation_last=True,
                          key=kp2, use_fused=False,
                          tm_max=128, tk_max=128, tn_max=128)
    x2 = jax.random.normal(kx, (3, 37, 200), jnp.float32)
    out_tiled = jax.block_until_ready(mlp_tiled(x2))
    ref_tiled = _reference_forward(mlp_tiled, x2)
    assert out_tiled.shape == (3, 37, 96), out_tiled.shape
    assert jnp.allclose(out_tiled, ref_tiled, atol=5e-2, rtol=5e-2), \
        "tiled path mismatch vs reference"

    print("KERNEL_OK")
</pallas_src>

<mosaic_0001>
module attributes {stable_mosaic.version = 11 : i64} {
  func.func @_mlp_fused_kernel(%arg0: i32, %arg1: memref<16x128xbf16, #tpu.memory_space<vmem>>, %arg2: memref<3x128x128xbf16, #tpu.memory_space<vmem>>, %arg3: memref<3x1x128xf32, #tpu.memory_space<vmem>>, %arg4: memref<16x128xf32, #tpu.memory_space<vmem>>) attributes {dimension_semantics = [#tpu.dimension_semantics<parallel>], iteration_bounds = array<i64: 1>, scalar_prefetch = 0 : i64, scratch_operands = 0 : i64, tpu.core_type = #tpu.core_type<tc>, window_params = [{transform_indices = @transform_0, window_bounds = array<i64: 16, 128>}, {pipeline_mode = #tpu.pipeline_mode<synchronous>, transform_indices = @transform_1, window_bounds = array<i64: 3, 128, 128>}, {pipeline_mode = #tpu.pipeline_mode<synchronous>, transform_indices = @transform_2, window_bounds = array<i64: 3, 1, 128>}, {transform_indices = @transform_3, window_bounds = array<i64: 16, 128>}]} {
    %c0 = arith.constant 0 : index
    %c0_0 = arith.constant 0 : index
    %0 = vector.load %arg1[%c0, %c0_0] : memref<16x128xbf16, #tpu.memory_space<vmem>>, vector<16x128xbf16>
    %c0_1 = arith.constant 0 : index
    %c0_2 = arith.constant 0 : index
    %c0_3 = arith.constant 0 : index
    %1 = vector.load %arg2[%c0_1, %c0_2, %c0_3] : memref<3x128x128xbf16, #tpu.memory_space<vmem>>, vector<1x128x128xbf16>
    %2 = vector.shape_cast %1 : vector<1x128x128xbf16> to vector<128x128xbf16>
    %cst = arith.constant dense<0.000000e+00> : vector<16x128xf32>
    %3 = tpu.matmul %0, %2, %cst {dimension_numbers = #tpu.dot_dimension_numbers<[1], [0], [0], [1], [0, 0, 1, 1], [], []>} : vector<16x128xbf16>, vector<128x128xbf16>, vector<16x128xf32> -> vector<16x128xf32>
    %c0_4 = arith.constant 0 : index
    %c0_5 = arith.constant 0 : index
    %c0_6 = arith.constant 0 : index
    %4 = vector.load %arg3[%c0_4, %c0_5, %c0_6] : memref<3x1x128xf32, #tpu.memory_space<vmem>>, vector<1x1x128xf32>
    %5 = vector.shape_cast %4 : vector<1x1x128xf32> to vector<1x128xf32>
    %6 = vector.broadcast %5 : vector<1x128xf32> to vector<16x128xf32>
    %7 = arith.addf %3, %6 : vector<16x128xf32>
    %cst_7 = arith.constant 0.000000e+00 : f32
    %8 = vector.broadcast %cst_7 : f32 to vector<16x128xf32>
    %9 = arith.maximumf %7, %8 : vector<16x128xf32>
    %10 = arith.truncf %9 : vector<16x128xf32> to vector<16x128xbf16>
    %c1 = arith.constant 1 : index
    %c0_8 = arith.constant 0 : index
    %c0_9 = arith.constant 0 : index
    %11 = vector.load %arg2[%c1, %c0_8, %c0_9] : memref<3x128x128xbf16, #tpu.memory_space<vmem>>, vector<1x128x128xbf16>
    %12 = vector.shape_cast %11 : vector<1x128x128xbf16> to vector<128x128xbf16>
    %cst_10 = arith.constant dense<0.000000e+00> : vector<16x128xf32>
    %13 = tpu.matmul %10, %12, %cst_10 {dimension_numbers = #tpu.dot_dimension_numbers<[1], [0], [0], [1], [0, 0, 1, 1], [], []>} : vector<16x128xbf16>, vector<128x128xbf16>, vector<16x128xf32> -> vector<16x128xf32>
    %c1_11 = arith.constant 1 : index
    %c0_12 = arith.constant 0 : index
    %c0_13 = arith.constant 0 : index
    %14 = vector.load %arg3[%c1_11, %c0_12, %c0_13] : memref<3x1x128xf32, #tpu.memory_space<vmem>>, vector<1x1x128xf32>
    %15 = vector.shape_cast %14 : vector<1x1x128xf32> to vector<1x128xf32>
    %16 = vector.broadcast %15 : vector<1x128xf32> to vector<16x128xf32>
    %17 = arith.addf %13, %16 : vector<16x128xf32>
    %cst_14 = arith.constant 0.000000e+00 : f32
    %18 = vector.broadcast %cst_14 : f32 to vector<16x128xf32>
    %19 = arith.maximumf %17, %18 : vector<16x128xf32>
    %20 = arith.truncf %19 : vector<16x128xf32> to vector<16x128xbf16>
    %c2 = arith.constant 2 : index
    %c0_15 = arith.constant 0 : index
    %c0_16 = arith.constant 0 : index
    %21 = vector.load %arg2[%c2, %c0_15, %c0_16] : memref<3x128x128xbf16, #tpu.memory_space<vmem>>, vector<1x128x128xbf16>
    %22 = vector.shape_cast %21 : vector<1x128x128xbf16> to vector<128x128xbf16>
    %cst_17 = arith.constant dense<0.000000e+00> : vector<16x128xf32>
    %23 = tpu.matmul %20, %22, %cst_17 {dimension_numbers = #tpu.dot_dimension_numbers<[1], [0], [0], [1], [0, 0, 1, 1], [], []>} : vector<16x128xbf16>, vector<128x128xbf16>, vector<16x128xf32> -> vector<16x128xf32>
    %c2_18 = arith.constant 2 : index
    %c0_19 = arith.constant 0 : index
    %c0_20 = arith.constant 0 : index
    %24 = vector.load %arg3[%c2_18, %c0_19, %c0_20] : memref<3x1x128xf32, #tpu.memory_space<vmem>>, vector<1x1x128xf32>
    %25 = vector.shape_cast %24 : vector<1x1x128xf32> to vector<1x128xf32>
    %26 = vector.broadcast %25 : vector<1x128xf32> to vector<16x128xf32>
    %27 = arith.addf %23, %26 : vector<16x128xf32>
    %c0_21 = arith.constant 0 : index
    %c0_22 = arith.constant 0 : index
    %28 = vector.load %arg4[%c0_21, %c0_22] : memref<16x128xf32, #tpu.memory_space<vmem>>, vector<16x128xf32>
    tpu.vector_store %arg4[%c0_21, %c0_22], %27 {strides = array<i32>} : memref<16x128xf32, #tpu.memory_space<vmem>>, vector<16x128xf32>,
    return
  }
  func.func @transform_0(%arg0: i32) -> (i32, i32) {
    %c0_i32 = arith.constant 0 : i32
    %c0_i32_0 = arith.constant 0 : i32
    return %arg0, %c0_i32 : i32, i32
  }
  func.func @transform_1(%arg0: i32) -> (i32, i32, i32) {
    %c0_i32 = arith.constant 0 : i32
    %c0_i32_0 = arith.constant 0 : i32
    %c0_i32_1 = arith.constant 0 : i32
    %c0_i32_2 = arith.constant 0 : i32
    return %c0_i32, %c0_i32_0, %c0_i32_1 : i32, i32, i32
  }
  func.func @transform_2(%arg0: i32) -> (i32, i32, i32) {
    %c0_i32 = arith.constant 0 : i32
    %c0_i32_0 = arith.constant 0 : i32
    %c0_i32_1 = arith.constant 0 : i32
    %c0_i32_2 = arith.constant 0 : i32
    return %c0_i32, %c0_i32_0, %c0_i32_1 : i32, i32, i32
  }
  func.func @transform_3(%arg0: i32) -> (i32, i32) {
    %c0_i32 = arith.constant 0 : i32
    %c0_i32_0 = arith.constant 0 : i32
    return %arg0, %c0_i32 : i32, i32
  }
}

</mosaic_0001>

<llo_original>
// kernel: tpu_custom_call.1
$region0: #{tpu_custom_call.1}
  #allocation0 [shape = 'u32[]', space=smem, size = 0x4, offset = 0x4, fixed_abs, tag = 'smem constant byte address 0x4 - core index']
  #allocation1 [shape = 'u32[144,128]{1,0:T(1,128)}', space=vmem, size = 0x12000, scoped, tag = 'internal scratch']
  %s0 = inlined_call_operand.hbm [shape: bf16[16,128], index: 0, kind: input, shape index: {}]
  %s1 = inlined_call_operand.hbm [shape: bf16[3,128,128], index: 1, kind: input, shape index: {}]
  %s2 = inlined_call_operand.vmem [shape: f32[3,1,128], index: 2, kind: input, shape index: {}]
  %s3 = inlined_call_operand.hbm [shape: f32[16,128], index: 3, kind: output, shape index: {}]
  %s4 = sld [smem:[#allocation0]]
  $region30: #{tpu_custom_call.1} parent=0
    _
  %s6 = ssub.s32 1, %s4
  %s7 = scalar_select 0, %s6, %s4
  $region1: #{tpu_custom_call.1} parent=0
    #allocation2 [shape = 'u8[4096]{0}', space=vmem, size = 0x1000, scoped, tag = 'input window, operand 0, single buffered']
    #allocation3 [shape = 's32[1]{0}', space=sflag, size = 0x4, scoped, tag = 'scoped memory for tpu_custom_call.1']
    #allocation4 [shape = 's32[1]{0}', space=sflag, size = 0x4, scoped, tag = 'scoped memory for tpu_custom_call.1']
    #allocation5 [shape = 'u8[98304]{0}', space=vmem, size = 0x18000, scoped, tag = 'input window, operand 1, single buffered']
    #allocation6 [shape = 's32[1]{0}', space=sflag, size = 0x4, scoped, tag = 'scoped memory for tpu_custom_call.1']
    #allocation7 [shape = 'u8[8192]{0}', space=vmem, size = 0x2000, scoped, tag = 'output window, operand 0, single buffered']
    %8 = vsyncpa [#allocation3], 0
    %9 = vsyncpa [#allocation6], 0
    %10 = vsyncpa [#allocation4], 0
    // Predicated region
    $region2: #{tpu_custom_call.1} parent=1 // pred_check
      _
    $region3: #{tpu_custom_call.1} parent=1 // pred_check_branch
      %12 = sbr.rel (0) target = $region5
    $region4: #{tpu_custom_call.1} parent=1 // pred_region
      %s14 = ssub.s32 128, 128
      %15 = vsyncadd [#allocation3], %s14
      %s16 = sshll.u32 [#allocation2], 4
      %s17 = int_to_ptr.vmem [resolvable:$true] %s16
      %22 = dma.hbm_to_vmem [thread:$0]  %s0, 128, %s17, [#allocation3], 64, 64, 4
    $region5: #{tpu_custom_call.1} parent=1 // pred_fallthru
      _
    // Predicated region
    $region6: #{tpu_custom_call.1} parent=1 // pred_check
      _
    $region7: #{tpu_custom_call.1} parent=1 // pred_check_branch
      %24 = sbr.rel (0) target = $region9
    $region8: #{tpu_custom_call.1} parent=1 // pred_region
      %s26 = ssub.s32 3072, 3072
      %27 = vsyncadd [#allocation6], %s26
      %s28 = sshll.u32 [#allocation5], 4
      %s29 = int_to_ptr.vmem [resolvable:$true] %s28
      %34 = dma.hbm_to_vmem [thread:$0]  %s1, 3072, %s29, [#allocation6], 64, 64, 4
    $region9: #{tpu_custom_call.1} parent=1 // pred_fallthru
      _
    // Predicated region
    $region10: #{tpu_custom_call.1} parent=1 // pred_check
      _
    $region11: #{tpu_custom_call.1} parent=1 // pred_check_branch
      %36 = sbr.rel (0) target = $region13
    $region12: #{tpu_custom_call.1} parent=1 // pred_region
      _
    $region13: #{tpu_custom_call.1} parent=1 // pred_fallthru
      _
    // Predicated region
    $region14: #{tpu_custom_call.1} parent=1 // pred_check
      _
    $region15: #{tpu_custom_call.1} parent=1 // pred_check_branch
      %38 = sbr.rel (0) target = $region17
    $region16: #{tpu_custom_call.1} parent=1 // pred_region
      %39 = dma.done [#allocation3], 128
    $region17: #{tpu_custom_call.1} parent=1 // pred_fallthru
      _
    // Predicated region
    $region18: #{tpu_custom_call.1} parent=1 // pred_check
      _
    $region19: #{tpu_custom_call.1} parent=1 // pred_check_branch
      %41 = sbr.rel (0) target = $region21
    $region20: #{tpu_custom_call.1} parent=1 // pred_region
      %42 = dma.done [#allocation6], 3072
    $region21: #{tpu_custom_call.1} parent=1 // pred_fallthru
      _
    %v44 = vld [vmem:[#allocation2] sm:$0xf]
    %v45 = vld [vmem:[#allocation2 + $0x4] sm:$0xf]
    %v46 = vld [vmem:[#allocation5] sm:$0xf]
    %v47 = vld [vmem:[#allocation5 + $0x4] sm:$0xf]
    %v48 = vld [vmem:[#allocation5 + $0x8] sm:$0xf]
    %v49 = vld [vmem:[#allocation5 + $0xc] sm:$0xf]
    %v50 = vld [vmem:[#allocation5 + $0x10] sm:$0xf]
    %v51 = vld [vmem:[#allocation5 + $0x14] sm:$0xf]
    %v52 = vld [vmem:[#allocation5 + $0x18] sm:$0xf]
    %v53 = vld [vmem:[#allocation5 + $0x1c] sm:$0xf]
    %v54 = vld [vmem:[#allocation5 + $0x20] sm:$0xf]
    %v55 = vld [vmem:[#allocation5 + $0x24] sm:$0xf]
    %v56 = vld [vmem:[#allocation5 + $0x28] sm:$0xf]
    %v57 = vld [vmem:[#allocation5 + $0x2c] sm:$0xf]
    %v58 = vld [vmem:[#allocation5 + $0x30] sm:$0xf]
    %v59 = vld [vmem:[#allocation5 + $0x34] sm:$0xf]
    %v60 = vld [vmem:[#allocation5 + $0x38] sm:$0xf]
    %v61 = vld [vmem:[#allocation5 + $0x3c] sm:$0xf]
    %v62 = vld [vmem:[%s2] sm:$0x1]
    %v64 = vlaneseq
    %v65 = vshrl.u32 %v64, 7
    %v66 = vsub.s32 0, %v65
    %v67 = vrot.slane %v62, %v66
    %v71 = vunpack.c.l.b16 %v44
    %v72 = vunpack.c.l.b16 %v45
    %v73 = vpack.c.b16 %v72, %v71
    %v91 = vunpack.c.l.b16 %v46
    %v92 = vunpack.c.l.b16 %v47
    %v93 = vunpack.c.l.b16 %v48
    %v94 = vunpack.c.l.b16 %v49
    %v95 = vunpack.c.l.b16 %v50
    %v96 = vunpack.c.l.b16 %v51
    %v97 = vunpack.c.l.b16 %v52
    %v98 = vunpack.c.l.b16 %v53
    %v99 = vunpack.c.l.b16 %v54
    %v100 = vunpack.c.l.b16 %v55
    %v101 = vunpack.c.l.b16 %v56
    %v102 = vunpack.c.l.b16 %v57
    %v103 = vunpack.c.l.b16 %v58
    %v104 = vunpack.c.l.b16 %v59
    %v105 = vunpack.c.l.b16 %v60
    %v106 = vunpack.c.l.b16 %v61
    %v107 = vpack.c.b16 %v92, %v91
    %v108 = vpack.c.b16 %v94, %v93
    %v109 = vpack.c.b16 %v96, %v95
    %v110 = vpack.c.b16 %v98, %v97
    %v111 = vpack.c.b16 %v100, %v99
    %v112 = vpack.c.b16 %v102, %v101
    %v113 = vpack.c.b16 %v104, %v103
    %v114 = vpack.c.b16 %v106, %v105
    %123 = vmatprep.subr.bf16.mxu0 0
    %124 = vmatpush1.bf16.msra.mxu0 %v107
    %125 = vmatprep.subr.bf16.mxu0 0
    %126 = vmatpush1.bf16.msra.mxu0 %v108
    %127 = vmatprep.subr.bf16.mxu0 0
    %128 = vmatpush1.bf16.msra.mxu0 %v109
    %129 = vmatprep.subr.bf16.mxu0 0
    %130 = vmatpush1.bf16.msra.mxu0 %v110
    %131 = vmatprep.subr.bf16.mxu0 0
    %132 = vmatpush1.bf16.msra.mxu0 %v111
    %133 = vmatprep.subr.bf16.mxu0 0
    %134 = vmatpush1.bf16.msra.mxu0 %v112
    %135 = vmatprep.subr.bf16.mxu0 0
    %136 = vmatpush1.bf16.msra.mxu0 %v113
    %137 = vmatprep.subr.bf16.mxu0 0
    %138 = vmatpush1.bf16.msra.mxu0 %v114
    %139 = vmatprep.subr.bf16.mxu0 0
    %140 = vmatpush1.bf16.msra.mxu0 0
    %141 = vmatprep.subr.bf16.mxu0 0
    %142 = vmatpush1.bf16.msra.mxu0 0
    %143 = vmatprep.subr.bf16.mxu0 0
    %144 = vmatpush1.bf16.msra.mxu0 0
    %145 = vmatprep.subr.bf16.mxu0 0
    %146 = vmatpush1.bf16.msra.mxu0 0
    %147 = vmatprep.subr.bf16.mxu0 0
    %148 = vmatpush1.bf16.msra.mxu0 0
    %149 = vmatprep.subr.bf16.mxu0 0
    %150 = vmatpush1.bf16.msra.mxu0 0
    %151 = vmatprep.subr.bf16.mxu0 0
    %152 = vmatpush1.bf16.msra.mxu0 0
    %153 = vmatprep.subr.bf16.mxu0 0
    %154 = vmatpush1.bf16.msra.mxu0 0
    %155 = vmatprep.mubr.bf16.mxu0 0
    %156 = vmatmul.mubr.bf16.gmra.mrb[0].mxu0 %v73
    %v157 = vpop.f32.mrb[0].mxu0
    %v158 = vadd.f32 %v67, %v157
    %v159 = vpop.f32.mrb[0].mxu0
    %v160 = vpop.f32.mrb[0].mxu0
    %v161 = vadd.f32 %v67, %v160
    %v162 = vpop.f32.mrb[0].mxu0
    %163 = vdwg.mxu0
    %v164 = vmax.f32 %v158, 0.0
    %v165 = vmax.f32 %v161, 0.0
    %v166 = vpack.c.bf16 %v165, %v164
    %s167 = scalar_lea.vmem [#allocation5], 64
    %v168 = vld [vmem:[%s167] sm:$0xf]
    %v169 = vld [vmem:[%s167 + $0x4] sm:$0xf]
    %v170 = vld [vmem:[%s167 + $0x8] sm:$0xf]
    %v171 = vld [vmem:[%s167 + $0xc] sm:$0xf]
    %v172 = vld [vmem:[%s167 + $0x10] sm:$0xf]
    %v173 = vld [vmem:[%s167 + $0x14] sm:$0xf]
    %v174 = vld [vmem:[%s167 + $0x18] sm:$0xf]
    %v175 = vld [vmem:[%s167 + $0x1c] sm:$0xf]
    %v176 = vld [vmem:[%s167 + $0x20] sm:$0xf]
    %v177 = vld [vmem:[%s167 + $0x24] sm:$0xf]
    %v178 = vld [vmem:[%s167 + $0x28] sm:$0xf]
    %v179 = vld [vmem:[%s167 + $0x2c] sm:$0xf]
    %v180 = vld [vmem:[%s167 + $0x30] sm:$0xf]
    %v181 = vld [vmem:[%s167 + $0x34] sm:$0xf]
    %v182 = vld [vmem:[%s167 + $0x38] sm:$0xf]
    %v183 = vld [vmem:[%s167 + $0x3c] sm:$0xf]
    %s184 = scalar_lea.vmem %s2, 1
    %v185 = vld [vmem:[%s184] sm:$0x1]
    %v187 = vlaneseq
    %v188 = vshrl.u32 %v187, 7
    %v189 = vsub.s32 0, %v188
    %v190 = vrot.slane %v185, %v189
    %v208 = vunpack.c.l.b16 %v168
    %v209 = vunpack.c.l.b16 %v169
    %v210 = vunpack.c.l.b16 %v170
    %v211 = vunpack.c.l.b16 %v171
    %v212 = vunpack.c.l.b16 %v172
    %v213 = vunpack.c.l.b16 %v173
    %v214 = vunpack.c.l.b16 %v174
    %v215 = vunpack.c.l.b16 %v175
    %v216 = vunpack.c.l.b16 %v176
    %v217 = vunpack.c.l.b16 %v177
    %v218 = vunpack.c.l.b16 %v178
    %v219 = vunpack.c.l.b16 %v179
    %v220 = vunpack.c.l.b16 %v180
    %v221 = vunpack.c.l.b16 %v181
    %v222 = vunpack.c.l.b16 %v182
    %v223 = vunpack.c.l.b16 %v183
    %v224 = vpack.c.b16 %v209, %v208
    %v225 = vpack.c.b16 %v211, %v210
    %v226 = vpack.c.b16 %v213, %v212
    %v227 = vpack.c.b16 %v215, %v214
    %v228 = vpack.c.b16 %v217, %v216
    %v229 = vpack.c.b16 %v219, %v218
    %v230 = vpack.c.b16 %v221, %v220
    %v231 = vpack.c.b16 %v223, %v222
    %240 = vmatprep.subr.bf16.mxu0 0
    %241 = vmatpush1.bf16.msra.mxu0 %v224
    %242 = vmatprep.subr.bf16.mxu0 0
    %243 = vmatpush1.bf16.msra.mxu0 %v225
    %244 = vmatprep.subr.bf16.mxu0 0
    %245 = vmatpush1.bf16.msra.mxu0 %v226
    %246 = vmatprep.subr.bf16.mxu0 0
    %247 = vmatpush1.bf16.msra.mxu0 %v227
    %248 = vmatprep.subr.bf16.mxu0 0
    %249 = vmatpush1.bf16.msra.mxu0 %v228
    %250 = vmatprep.subr.bf16.mxu0 0
    %251 = vmatpush1.bf16.msra.mxu0 %v229
    %252 = vmatprep.subr.bf16.mxu0 0
    %253 = vmatpush1.bf16.msra.mxu0 %v230
    %254 = vmatprep.subr.bf16.mxu0 0
    %255 = vmatpush1.bf16.msra.mxu0 %v231
    %256 = vmatprep.subr.bf16.mxu0 0
    %257 = vmatpush1.bf16.msra.mxu0 0
    %258 = vmatprep.subr.bf16.mxu0 0
    %259 = vmatpush1.bf16.msra.mxu0 0
    %260 = vmatprep.subr.bf16.mxu0 0
    %261 = vmatpush1.bf16.msra.mxu0 0
    %262 = vmatprep.subr.bf16.mxu0 0
    %263 = vmatpush1.bf16.msra.mxu0 0
    %264 = vmatprep.subr.bf16.mxu0 0
    %265 = vmatpush1.bf16.msra.mxu0 0
    %266 = vmatprep.subr.bf16.mxu0 0
    %267 = vmatpush1.bf16.msra.mxu0 0
    %268 = vmatprep.subr.bf16.mxu0 0
    %269 = vmatpush1.bf16.msra.mxu0 0
    %270 = vmatprep.subr.bf16.mxu0 0
    %271 = vmatpush1.bf16.msra.mxu0 0
    %272 = vmatprep.mubr.bf16.mxu0 0
    %273 = vmatmul.mubr.bf16.gmra.mrb[0].mxu0 %v166
    %v274 = vpop.f32.mrb[0].mxu0
    %v275 = vadd.f32 %v190, %v274
    %v276 = vpop.f32.mrb[0].mxu0
    %v277 = vpop.f32.mrb[0].mxu0
    %v278 = vadd.f32 %v190, %v277
    %v279 = vpop.f32.mrb[0].mxu0
    %280 = vdwg.mxu0
    %v281 = vmax.f32 %v275, 0.0
    %v282 = vmax.f32 %v278, 0.0
    %v283 = vpack.c.bf16 %v282, %v281
    %s284 = scalar_lea.vmem [#allocation5], 128
    %v285 = vld [vmem:[%s284] sm:$0xf]
    %v286 = vld [vmem:[%s284 + $0x4] sm:$0xf]
    %v287 = vld [vmem:[%s284 + $0x8] sm:$0xf]
    %v288 = vld [vmem:[%s284 + $0xc] sm:$0xf]
    %v289 = vld [vmem:[%s284 + $0x10] sm:$0xf]
    %v290 = vld [vmem:[%s284 + $0x14] sm:$0xf]
    %v291 = vld [vmem:[%s284 + $0x18] sm:$0xf]
    %v292 = vld [vmem:[%s284 + $0x1c] sm:$0xf]
    %v293 = vld [vmem:[%s284 + $0x20] sm:$0xf]
    %v294 = vld [vmem:[%s284 + $0x24] sm:$0xf]
    %v295 = vld [vmem:[%s284 + $0x28] sm:$0xf]
    %v296 = vld [vmem:[%s284 + $0x2c] sm:$0xf]
    %v297 = vld [vmem:[%s284 + $0x30] sm:$0xf]
    %v298 = vld [vmem:[%s284 + $0x34] sm:$0xf]
    %v299 = vld [vmem:[%s284 + $0x38] sm:$0xf]
    %v300 = vld [vmem:[%s284 + $0x3c] sm:$0xf]
    %s301 = scalar_lea.vmem %s2, 2
    %v302 = vld [vmem:[%s301] sm:$0x1]
    %v304 = vlaneseq
    %v305 = vshrl.u32 %v304, 7
    %v306 = vsub.s32 0, %v305
    %v307 = vrot.slane %v302, %v306
    %v325 = vunpack.c.l.b16 %v285
    %v326 = vunpack.c.l.b16 %v286
    %v327 = vunpack.c.l.b16 %v287
    %v328 = vunpack.c.l.b16 %v288
    %v329 = vunpack.c.l.b16 %v289
    %v330 = vunpack.c.l.b16 %v290
    %v331 = vunpack.c.l.b16 %v291
    %v332 = vunpack.c.l.b16 %v292
    %v333 = vunpack.c.l.b16 %v293
    %v334 = vunpack.c.l.b16 %v294
    %v335 = vunpack.c.l.b16 %v295
    %v336 = vunpack.c.l.b16 %v296
    %v337 = vunpack.c.l.b16 %v297
    %v338 = vunpack.c.l.b16 %v298
    %v339 = vunpack.c.l.b16 %v299
    %v340 = vunpack.c.l.b16 %v300
    %v341 = vpack.c.b16 %v326, %v325
    %v342 = vpack.c.b16 %v328, %v327
    %v343 = vpack.c.b16 %v330, %v329
    %v344 = vpack.c.b16 %v332, %v331
    %v345 = vpack.c.b16 %v334, %v333
    %v346 = vpack.c.b16 %v336, %v335
    %v347 = vpack.c.b16 %v338, %v337
    %v348 = vpack.c.b16 %v340, %v339
    %357 = vmatprep.subr.bf16.mxu0 0
    %358 = vmatpush1.bf16.msra.mxu0 %v341
    %359 = vmatprep.subr.bf16.mxu0 0
    %360 = vmatpush1.bf16.msra.mxu0 %v342
    %361 = vmatprep.subr.bf16.mxu0 0
    %362 = vmatpush1.bf16.msra.mxu0 %v343
    %363 = vmatprep.subr.bf16.mxu0 0
    %364 = vmatpush1.bf16.msra.mxu0 %v344
    %365 = vmatprep.subr.bf16.mxu0 0
    %366 = vmatpush1.bf16.msra.mxu0 %v345
    %367 = vmatprep.subr.bf16.mxu0 0
    %368 = vmatpush1.bf16.msra.mxu0 %v346
    %369 = vmatprep.subr.bf16.mxu0 0
    %370 = vmatpush1.bf16.msra.mxu0 %v347
    %371 = vmatprep.subr.bf16.mxu0 0
    %372 = vmatpush1.bf16.msra.mxu0 %v348
    %373 = vmatprep.subr.bf16.mxu0 0
    %374 = vmatpush1.bf16.msra.mxu0 0
    %375 = vmatprep.subr.bf16.mxu0 0
    %376 = vmatpush1.bf16.msra.mxu0 0
    %377 = vmatprep.subr.bf16.mxu0 0
    %378 = vmatpush1.bf16.msra.mxu0 0
    %379 = vmatprep.subr.bf16.mxu0 0
    %380 = vmatpush1.bf16.msra.mxu0 0
    %381 = vmatprep.subr.bf16.mxu0 0
    %382 = vmatpush1.bf16.msra.mxu0 0
    %383 = vmatprep.subr.bf16.mxu0 0
    %384 = vmatpush1.bf16.msra.mxu0 0
    %385 = vmatprep.subr.bf16.mxu0 0
    %386 = vmatpush1.bf16.msra.mxu0 0
    %387 = vmatprep.subr.bf16.mxu0 0
    %388 = vmatpush1.bf16.msra.mxu0 0
    %389 = vmatprep.mubr.bf16.mxu0 0
    %390 = vmatmul.mubr.bf16.gmra.mrb[0].mxu0 %v283
    %v391 = vpop.f32.mrb[0].mxu0
    %v392 = vadd.f32 %v307, %v391
    %v393 = vpop.f32.mrb[0].mxu0
    %v394 = vpop.f32.mrb[0].mxu0
    %v395 = vadd.f32 %v307, %v394
    %v396 = vpop.f32.mrb[0].mxu0
    %397 = vdwg.mxu0
    %398 = vst [vmem:[#allocation7] sm:$0xff] %v392
    %399 = vst [vmem:[#allocation7 + $0x8] sm:$0xff] %v395
    // Predicated region
    $region22: #{tpu_custom_call.1} parent=1 // pred_check
      _
    $region23: #{tpu_custom_call.1} parent=1 // pred_check_branch
      %401 = sbr.rel (0) target = $region25
    $region24: #{tpu_custom_call.1} parent=1 // pred_region
      %s403 = ssub.s32 256, 256
      %404 = vsyncadd [#allocation4], %s403
      %s405 = sshll.u32 [#allocation7], 4
      %s406 = int_to_ptr.vmem [resolvable:$true] %s405
      %411 = dma.vmem_to_hbm [thread:$0]  %s406, 256, %s3, [#allocation4], 128, 128, 8
    $region25: #{tpu_custom_call.1} parent=1 // pred_fallthru
      _
    // Predicated region
    $region26: #{tpu_custom_call.1} parent=1 // pred_check
      _
    $region27: #{tpu_custom_call.1} parent=1 // pred_check_branch
      %413 = sbr.rel (0) target = $region29
    $region28: #{tpu_custom_call.1} parent=1 // pred_region
      %414 = dma.done [#allocation4], 256
    $region29: #{tpu_custom_call.1} parent=1 // pred_fallthru
      _
    %415 = vsyncpa [#allocation3], 1
    %416 = vsyncpa [#allocation6], 1
    %417 = vsyncpa [#allocation4], 1

</llo_original>
